<compile_context>
chip_gen: v5e
topology: v5e:2x2
jax: 0.10.0
libtpu: 0.0.40
codegen_flags: <defaults>
</compile_context>

<pallas_src>
import jax
import jax.numpy as jnp
from jax.experimental import pallas as pl
from jax.experimental.pallas import tpu as pltpu

INPUT_SIZE = 8
HIDDEN_SIZE = 64
M_TILE = 256  # batch-tile rows per grid step (128 also fine on v5e)


def _mlp_batch_kernel(x_ref, w1_ref, b1_ref, w2_ref, b2_ref, w3_ref, b3_ref, o_ref):
    # x:  (M_TILE, IN)        w1: (IN, H)    b1: (1, H)
    # w2: (H, H)              b2: (1, H)
    # w3: (1, H)  (lane-dense row of the original (H, 1) weight)
    # b3: (1, 1)              o:  (M_TILE, 1)
    x = x_ref[...]
    h1 = jnp.dot(x, w1_ref[...], preferred_element_type=jnp.float32) + b1_ref[...]
    h1 = jnp.maximum(h1, 0.0)
    h2 = jnp.dot(h1, w2_ref[...], preferred_element_type=jnp.float32) + b2_ref[...]
    h2 = jnp.maximum(h2, 0.0)
    # Final Linear(64, 1) as a VPU multiply + cross-lane (XLU) reduction instead
    # of an N=1 MXU matmul against a lane-sparse (64, 1) operand.
    out = jnp.sum(h2 * w3_ref[...], axis=-1, keepdims=True) + b3_ref[...]
    o_ref[...] = out.astype(o_ref.dtype)


def mlp_forward_batched_pallas(x_rows, params):
    """Batched forward: x_rows is (B, INPUT_SIZE) of already-preprocessed rows.

    Returns a (B,) vector of scalar outputs.
    """
    w1, b1, w2, b2, w3, b3 = params
    B = x_rows.shape[0]
    num_tiles = max(pl.cdiv(B, M_TILE), 1)
    b_pad = num_tiles * M_TILE
    if b_pad != B:
        x_rows = jnp.pad(x_rows, ((0, b_pad - B), (0, 0)))

    b1_row = b1.reshape(1, HIDDEN_SIZE)
    b2_row = b2.reshape(1, HIDDEN_SIZE)
    w3_row = w3.reshape(1, HIDDEN_SIZE)  # lane-dense storage of the (H, 1) weight
    b3_row = b3.reshape(1, 1)

    out = pl.pallas_call(
        _mlp_batch_kernel,
        out_shape=jax.ShapeDtypeStruct((b_pad, 1), x_rows.dtype),
        grid=(num_tiles,),
        in_specs=[
            # Activations: a new batch tile every grid step.
            pl.BlockSpec((M_TILE, INPUT_SIZE), lambda i: (i, 0)),
            # Weights / biases: constant block index -> VMEM-resident, DMA'd once.
            pl.BlockSpec((INPUT_SIZE, HIDDEN_SIZE), lambda i: (0, 0)),
            pl.BlockSpec((1, HIDDEN_SIZE), lambda i: (0, 0)),
            pl.BlockSpec((HIDDEN_SIZE, HIDDEN_SIZE), lambda i: (0, 0)),
            pl.BlockSpec((1, HIDDEN_SIZE), lambda i: (0, 0)),
            pl.BlockSpec((1, HIDDEN_SIZE), lambda i: (0, 0)),
            pl.BlockSpec((1, 1), lambda i: (0, 0)),
        ],
        out_specs=pl.BlockSpec((M_TILE, 1), lambda i: (i, 0)),
        compiler_params=pltpu.CompilerParams(
            dimension_semantics=("parallel",)),
    )(x_rows, w1, b1_row, w2, b2_row, w3_row, b3_row)

    return out[:B, 0]


def _preprocess(x):
    """Replicates the torch pad-left / take-last-INPUT_SIZE logic (static shapes)."""
    n = x.shape[0]
    if n == 0:
        return jnp.zeros((INPUT_SIZE,), dtype=jnp.float32)
    if n > INPUT_SIZE:
        return x[-INPUT_SIZE:]
    return jnp.concatenate([jnp.zeros((INPUT_SIZE - n,), dtype=x.dtype), x])


def mlp_forward_pallas(x, params):
    """Original single-sample SimpleMLP.forward semantics (1-D x -> scalar)."""
    row = _preprocess(x).reshape(1, INPUT_SIZE)
    out = mlp_forward_batched_pallas(row, params)
    return out.reshape(())  # torch .squeeze() -> scalar


def init_params(key):
    """Deterministic init mimicking nn.Linear defaults (uniform +/- 1/sqrt(fan_in))."""
    ks = jax.random.split(key, 6)

    def lin(kw, kb, fan_in, fan_out):
        bound = 1.0 / jnp.sqrt(fan_in)
        # Stored as (in, out) so the kernel computes x @ W.
        w = jax.random.uniform(kw, (fan_in, fan_out), jnp.float32, -bound, bound)
        b = jax.random.uniform(kb, (fan_out,), jnp.float32, -bound, bound)
        return w, b

    w1, b1 = lin(ks[0], ks[1], INPUT_SIZE, HIDDEN_SIZE)
    w2, b2 = lin(ks[2], ks[3], HIDDEN_SIZE, HIDDEN_SIZE)
    w3, b3 = lin(ks[4], ks[5], HIDDEN_SIZE, 1)
    return (w1, b1, w2, b2, w3, b3)


def mlp_forward_ref(x, params):
    """Pure-JAX single-sample reference."""
    w1, b1, w2, b2, w3, b3 = params
    p = _preprocess(x)
    h1 = jnp.maximum(p @ w1 + b1, 0.0)
    h2 = jnp.maximum(h1 @ w2 + b2, 0.0)
    return (h2 @ w3 + b3).reshape(())


def mlp_forward_batched_ref(x_rows, params):
    """Pure-JAX batched reference ((B, IN) -> (B,))."""
    w1, b1, w2, b2, w3, b3 = params
    h1 = jnp.maximum(x_rows @ w1 + b1, 0.0)
    h2 = jnp.maximum(h1 @ w2 + b2, 0.0)
    return (h2 @ w3 + b3)[:, 0]


if __name__ == "__main__":
    key = jax.random.PRNGKey(0)
    kp, kx, kb = jax.random.split(key, 3)
    params = init_params(kp)

    # --- single-sample forward (matches the torch module's forward) ---------
    x = jax.random.normal(kx, (8,), dtype=jnp.float32)            # len == input_size
    y = jax.block_until_ready(mlp_forward_pallas(x, params))
    assert jnp.allclose(y, mlp_forward_ref(x, params), atol=1e-5, rtol=1e-5)

    x_long = jax.random.normal(kx, (12,), dtype=jnp.float32)      # truncation branch
    y_long = jax.block_until_ready(mlp_forward_pallas(x_long, params))
    assert jnp.allclose(y_long, mlp_forward_ref(x_long, params), atol=1e-5, rtol=1e-5)

    x_short = jax.random.normal(kx, (5,), dtype=jnp.float32)      # left-pad branch
    y_short = jax.block_until_ready(mlp_forward_pallas(x_short, params))
    assert jnp.allclose(y_short, mlp_forward_ref(x_short, params), atol=1e-5, rtol=1e-5)

    # --- batched forward: amortizes launch/DMA overhead over the grid -------
    B = 300  # exercises batch-tile padding (padded to 2 * M_TILE = 512 rows)
    x_batch = jax.random.normal(kb, (B, INPUT_SIZE), dtype=jnp.float32)
    y_batch = jax.block_until_ready(mlp_forward_batched_pallas(x_batch, params))
    y_batch_ref = mlp_forward_batched_ref(x_batch, params)
    assert y_batch.shape == (B,)
    assert jnp.allclose(y_batch, y_batch_ref, atol=1e-5, rtol=1e-5)

    print("KERNEL_OK")
</pallas_src>

<mosaic_0001>
module attributes {stable_mosaic.version = 11 : i64} {
  func.func @_mlp_batch_kernel(%arg0: i32, %arg1: memref<256x8xf32, #tpu.memory_space<vmem>>, %arg2: memref<8x64xf32, #tpu.memory_space<vmem>>, %arg3: memref<1x64xf32, #tpu.memory_space<vmem>>, %arg4: memref<64x64xf32, #tpu.memory_space<vmem>>, %arg5: memref<1x64xf32, #tpu.memory_space<vmem>>, %arg6: memref<1x64xf32, #tpu.memory_space<vmem>>, %arg7: memref<1x1xf32, #tpu.memory_space<vmem>>, %arg8: memref<256x1xf32, #tpu.memory_space<vmem>>) attributes {dimension_semantics = [#tpu.dimension_semantics<parallel>], iteration_bounds = array<i64: 1>, scalar_prefetch = 0 : i64, scratch_operands = 0 : i64, tpu.core_type = #tpu.core_type<tc>, window_params = [{transform_indices = @transform_0, window_bounds = array<i64: 256, 8>}, {pipeline_mode = #tpu.pipeline_mode<synchronous>, transform_indices = @transform_1, window_bounds = array<i64: 8, 64>}, {pipeline_mode = #tpu.pipeline_mode<synchronous>, transform_indices = @transform_2, window_bounds = array<i64: 1, 64>}, {pipeline_mode = #tpu.pipeline_mode<synchronous>, transform_indices = @transform_3, window_bounds = array<i64: 64, 64>}, {pipeline_mode = #tpu.pipeline_mode<synchronous>, transform_indices = @transform_4, window_bounds = array<i64: 1, 64>}, {pipeline_mode = #tpu.pipeline_mode<synchronous>, transform_indices = @transform_5, window_bounds = array<i64: 1, 64>}, {pipeline_mode = #tpu.pipeline_mode<synchronous>, transform_indices = @transform_6, window_bounds = array<i64: 1, 1>}, {transform_indices = @transform_7, window_bounds = array<i64: 256, 1>}]} {
    %c0 = arith.constant 0 : index
    %c0_0 = arith.constant 0 : index
    %0 = vector.load %arg1[%c0, %c0_0] : memref<256x8xf32, #tpu.memory_space<vmem>>, vector<256x8xf32>
    %c0_1 = arith.constant 0 : index
    %c0_2 = arith.constant 0 : index
    %1 = vector.load %arg2[%c0_1, %c0_2] : memref<8x64xf32, #tpu.memory_space<vmem>>, vector<8x64xf32>
    %cst = arith.constant dense<0.000000e+00> : vector<256x64xf32>
    %2 = tpu.matmul %0, %1, %cst {dimension_numbers = #tpu.dot_dimension_numbers<[1], [0], [0], [1], [0, 0, 1, 1], [], []>} : vector<256x8xf32>, vector<8x64xf32>, vector<256x64xf32> -> vector<256x64xf32>
    %c0_3 = arith.constant 0 : index
    %c0_4 = arith.constant 0 : index
    %3 = vector.load %arg3[%c0_3, %c0_4] : memref<1x64xf32, #tpu.memory_space<vmem>>, vector<1x64xf32>
    %4 = vector.broadcast %3 : vector<1x64xf32> to vector<256x64xf32>
    %5 = arith.addf %2, %4 : vector<256x64xf32>
    %cst_5 = arith.constant 0.000000e+00 : f32
    %6 = vector.broadcast %cst_5 : f32 to vector<256x64xf32>
    %7 = arith.maximumf %5, %6 : vector<256x64xf32>
    %c0_6 = arith.constant 0 : index
    %c0_7 = arith.constant 0 : index
    %8 = vector.load %arg4[%c0_6, %c0_7] : memref<64x64xf32, #tpu.memory_space<vmem>>, vector<64x64xf32>
    %cst_8 = arith.constant dense<0.000000e+00> : vector<256x64xf32>
    %9 = tpu.matmul %7, %8, %cst_8 {dimension_numbers = #tpu.dot_dimension_numbers<[1], [0], [0], [1], [0, 0, 1, 1], [], []>} : vector<256x64xf32>, vector<64x64xf32>, vector<256x64xf32> -> vector<256x64xf32>
    %c0_9 = arith.constant 0 : index
    %c0_10 = arith.constant 0 : index
    %10 = vector.load %arg5[%c0_9, %c0_10] : memref<1x64xf32, #tpu.memory_space<vmem>>, vector<1x64xf32>
    %11 = vector.broadcast %10 : vector<1x64xf32> to vector<256x64xf32>
    %12 = arith.addf %9, %11 : vector<256x64xf32>
    %cst_11 = arith.constant 0.000000e+00 : f32
    %13 = vector.broadcast %cst_11 : f32 to vector<256x64xf32>
    %14 = arith.maximumf %12, %13 : vector<256x64xf32>
    %c0_12 = arith.constant 0 : index
    %c0_13 = arith.constant 0 : index
    %15 = vector.load %arg6[%c0_12, %c0_13] : memref<1x64xf32, #tpu.memory_space<vmem>>, vector<1x64xf32>
    %16 = vector.broadcast %15 : vector<1x64xf32> to vector<256x64xf32>
    %17 = arith.mulf %14, %16 : vector<256x64xf32>
    %cst_14 = arith.constant dense<0.000000e+00> : vector<256xf32>
    %18 = vector.multi_reduction <add>, %17, %cst_14 [1] : vector<256x64xf32> to vector<256xf32>
    %19 = vector.shape_cast %18 : vector<256xf32> to vector<256x1xf32>
    %c0_15 = arith.constant 0 : index
    %c0_16 = arith.constant 0 : index
    %20 = vector.load %arg7[%c0_15, %c0_16] : memref<1x1xf32, #tpu.memory_space<vmem>>, vector<1x1xf32>
    %21 = vector.broadcast %20 : vector<1x1xf32> to vector<256x1xf32>
    %22 = arith.addf %19, %21 : vector<256x1xf32>
    %c0_17 = arith.constant 0 : index
    %c0_18 = arith.constant 0 : index
    %23 = vector.load %arg8[%c0_17, %c0_18] : memref<256x1xf32, #tpu.memory_space<vmem>>, vector<256x1xf32>
    tpu.vector_store %arg8[%c0_17, %c0_18], %22 {strides = array<i32>} : memref<256x1xf32, #tpu.memory_space<vmem>>, vector<256x1xf32>,
    return
  }
  func.func @transform_0(%arg0: i32) -> (i32, i32) {
    %c0_i32 = arith.constant 0 : i32
    %c0_i32_0 = arith.constant 0 : i32
    return %arg0, %c0_i32 : i32, i32
  }
  func.func @transform_1(%arg0: i32) -> (i32, i32) {
    %c0_i32 = arith.constant 0 : i32
    %c0_i32_0 = arith.constant 0 : i32
    %c0_i32_1 = arith.constant 0 : i32
    return %c0_i32, %c0_i32_0 : i32, i32
  }
  func.func @transform_2(%arg0: i32) -> (i32, i32) {
    %c0_i32 = arith.constant 0 : i32
    %c0_i32_0 = arith.constant 0 : i32
    %c0_i32_1 = arith.constant 0 : i32
    return %c0_i32, %c0_i32_0 : i32, i32
  }
  func.func @transform_3(%arg0: i32) -> (i32, i32) {
    %c0_i32 = arith.constant 0 : i32
    %c0_i32_0 = arith.constant 0 : i32
    %c0_i32_1 = arith.constant 0 : i32
    return %c0_i32, %c0_i32_0 : i32, i32
  }
  func.func @transform_4(%arg0: i32) -> (i32, i32) {
    %c0_i32 = arith.constant 0 : i32
    %c0_i32_0 = arith.constant 0 : i32
    %c0_i32_1 = arith.constant 0 : i32
    return %c0_i32, %c0_i32_0 : i32, i32
  }
  func.func @transform_5(%arg0: i32) -> (i32, i32) {
    %c0_i32 = arith.constant 0 : i32
    %c0_i32_0 = arith.constant 0 : i32
    %c0_i32_1 = arith.constant 0 : i32
    return %c0_i32, %c0_i32_0 : i32, i32
  }
  func.func @transform_6(%arg0: i32) -> (i32, i32) {
    %c0_i32 = arith.constant 0 : i32
    %c0_i32_0 = arith.constant 0 : i32
    %c0_i32_1 = arith.constant 0 : i32
    return %c0_i32, %c0_i32_0 : i32, i32
  }
  func.func @transform_7(%arg0: i32) -> (i32, i32) {
    %c0_i32 = arith.constant 0 : i32
    %c0_i32_0 = arith.constant 0 : i32
    return %arg0, %c0_i32 : i32, i32
  }
}

</mosaic_0001>

<llo_original>
// kernel: tpu_custom_call.1
$region0: #{tpu_custom_call.1}
  #allocation0 [shape = 'u32[]', space=smem, size = 0x4, offset = 0x4, fixed_abs, tag = 'smem constant byte address 0x4 - core index']
  #allocation1 [shape = 'u32[72,128]{1,0:T(1,128)}', space=vmem, size = 0x9000, scoped, tag = 'internal scratch']
  #allocation2 [shape = 'f32[1,1]{1,0:T(1,128)S(1)}', space=vmem, size = 0x200, scoped, tag = 'scoped memory for tpu_custom_call.1']
  %s0 = inlined_call_operand.vmem [shape: f32[256,8], index: 0, kind: input, shape index: {}]
  %s1 = inlined_call_operand.vmem [shape: f32[8,64], index: 1, kind: input, shape index: {}]
  %s2 = inlined_call_operand.vmem [shape: f32[1,64], index: 2, kind: input, shape index: {}]
  %s3 = inlined_call_operand.vmem [shape: f32[64,64], index: 3, kind: input, shape index: {}]
  %s4 = inlined_call_operand.vmem [shape: f32[1,64], index: 4, kind: input, shape index: {}]
  %s5 = inlined_call_operand.vmem [shape: f32[1,64], index: 5, kind: input, shape index: {}]
  %s6 = inlined_call_operand.<no memory space> [shape: f32[1,1], index: 6, kind: input, shape index: {}]
  %s7 = inlined_call_operand.vmem [shape: f32[256,1], index: 7, kind: output, shape index: {}]
  %s8 = sld [smem:[#allocation0]]
  $region38: #{tpu_custom_call.1} parent=0
    _
  %s10 = ssub.s32 1, %s8
  %s11 = scalar_select 0, %s10, %s8
  %v12 = vstv %s6
  %13 = vst [vmem:[#allocation2] sm:$0x1] %v12
  // Predicated region
  $region2: #{tpu_custom_call.1} parent=0 // pred_check
    _
  $region3: #{tpu_custom_call.1} parent=0 // pred_check_branch
    %15 = sbr.rel (0) target = $region5
  $region4: #{tpu_custom_call.1} parent=0 // pred_region
    _
  $region5: #{tpu_custom_call.1} parent=0 // pred_fallthru
    _
  // Predicated region
  $region6: #{tpu_custom_call.1} parent=0 // pred_check
    _
  $region7: #{tpu_custom_call.1} parent=0 // pred_check_branch
    %17 = sbr.rel (0) target = $region9
  $region8: #{tpu_custom_call.1} parent=0 // pred_region
    _
  $region9: #{tpu_custom_call.1} parent=0 // pred_fallthru
    _
  // Predicated region
  $region10: #{tpu_custom_call.1} parent=0 // pred_check
    _
  $region11: #{tpu_custom_call.1} parent=0 // pred_check_branch
    %19 = sbr.rel (0) target = $region13
  $region12: #{tpu_custom_call.1} parent=0 // pred_region
    _
  $region13: #{tpu_custom_call.1} parent=0 // pred_fallthru
    _
  // Predicated region
  $region14: #{tpu_custom_call.1} parent=0 // pred_check
    _
  $region15: #{tpu_custom_call.1} parent=0 // pred_check_branch
    %21 = sbr.rel (0) target = $region17
  $region16: #{tpu_custom_call.1} parent=0 // pred_region
    _
  $region17: #{tpu_custom_call.1} parent=0 // pred_fallthru
    _
  // Predicated region
  $region18: #{tpu_custom_call.1} parent=0 // pred_check
    _
  $region19: #{tpu_custom_call.1} parent=0 // pred_check_branch
    %23 = sbr.rel (0) target = $region21
  $region20: #{tpu_custom_call.1} parent=0 // pred_region
    _
  $region21: #{tpu_custom_call.1} parent=0 // pred_fallthru
    _
  // Predicated region
  $region22: #{tpu_custom_call.1} parent=0 // pred_check
    _
  $region23: #{tpu_custom_call.1} parent=0 // pred_check_branch
    %25 = sbr.rel (0) target = $region25
  $region24: #{tpu_custom_call.1} parent=0 // pred_region
    _
  $region25: #{tpu_custom_call.1} parent=0 // pred_fallthru
    _
  // Predicated region
  $region26: #{tpu_custom_call.1} parent=0 // pred_check
    _
  $region27: #{tpu_custom_call.1} parent=0 // pred_check_branch
    %27 = sbr.rel (0) target = $region29
  $region28: #{tpu_custom_call.1} parent=0 // pred_region
    _
  $region29: #{tpu_custom_call.1} parent=0 // pred_fallthru
    _
  %v28 = vld [vmem:[%s0] sm:$0xff]
  %v29 = vld [vmem:[%s0 + $0x8] sm:$0xff]
  %v30 = vld [vmem:[%s0 + $0x10] sm:$0xff]
  %v31 = vld [vmem:[%s0 + $0x18] sm:$0xff]
  %v32 = vld [vmem:[%s0 + $0x20] sm:$0xff]
  %v33 = vld [vmem:[%s0 + $0x28] sm:$0xff]
  %v34 = vld [vmem:[%s0 + $0x30] sm:$0xff]
  %v35 = vld [vmem:[%s0 + $0x38] sm:$0xff]
  %v36 = vld [vmem:[%s0 + $0x40] sm:$0xff]
  %v37 = vld [vmem:[%s0 + $0x48] sm:$0xff]
  %v38 = vld [vmem:[%s0 + $0x50] sm:$0xff]
  %v39 = vld [vmem:[%s0 + $0x58] sm:$0xff]
  %v40 = vld [vmem:[%s0 + $0x60] sm:$0xff]
  %v41 = vld [vmem:[%s0 + $0x68] sm:$0xff]
  %v42 = vld [vmem:[%s0 + $0x70] sm:$0xff]
  %v43 = vld [vmem:[%s0 + $0x78] sm:$0xff]
  %v44 = vld [vmem:[%s0 + $0x80] sm:$0xff]
  %v45 = vld [vmem:[%s0 + $0x88] sm:$0xff]
  %v46 = vld [vmem:[%s0 + $0x90] sm:$0xff]
  %v47 = vld [vmem:[%s0 + $0x98] sm:$0xff]
  %v48 = vld [vmem:[%s0 + $0xa0] sm:$0xff]
  %v49 = vld [vmem:[%s0 + $0xa8] sm:$0xff]
  %v50 = vld [vmem:[%s0 + $0xb0] sm:$0xff]
  %v51 = vld [vmem:[%s0 + $0xb8] sm:$0xff]
  %v52 = vld [vmem:[%s0 + $0xc0] sm:$0xff]
  %v53 = vld [vmem:[%s0 + $0xc8] sm:$0xff]
  %v54 = vld [vmem:[%s0 + $0xd0] sm:$0xff]
  %v55 = vld [vmem:[%s0 + $0xd8] sm:$0xff]
  %v56 = vld [vmem:[%s0 + $0xe0] sm:$0xff]
  %v57 = vld [vmem:[%s0 + $0xe8] sm:$0xff]
  %v58 = vld [vmem:[%s0 + $0xf0] sm:$0xff]
  %v59 = vld [vmem:[%s0 + $0xf8] sm:$0xff]
  %v60 = vld [vmem:[%s1] sm:$0xff]
  %v61 = vld [vmem:[%s2] sm:$0x1]
  %v63 = vperm.slane %v61, 0
  %vm65 = vcmask 64512
  %v67 = vsel %vm65, %v28, 0
  %v70 = vsel %vm65, %v29, 0
  %v73 = vsel %vm65, %v30, 0
  %v76 = vsel %vm65, %v31, 0
  %v79 = vsel %vm65, %v32, 0
  %v82 = vsel %vm65, %v33, 0
  %v85 = vsel %vm65, %v34, 0
  %v88 = vsel %vm65, %v35, 0
  %v91 = vsel %vm65, %v36, 0
  %v94 = vsel %vm65, %v37, 0
  %v97 = vsel %vm65, %v38, 0
  %v100 = vsel %vm65, %v39, 0
  %v103 = vsel %vm65, %v40, 0
  %v106 = vsel %vm65, %v41, 0
  %v109 = vsel %vm65, %v42, 0
  %v112 = vsel %vm65, %v43, 0
  %v115 = vsel %vm65, %v44, 0
  %v118 = vsel %vm65, %v45, 0
  %v121 = vsel %vm65, %v46, 0
  %v124 = vsel %vm65, %v47, 0
  %v127 = vsel %vm65, %v48, 0
  %v130 = vsel %vm65, %v49, 0
  %v133 = vsel %vm65, %v50, 0
  %v136 = vsel %vm65, %v51, 0
  %v139 = vsel %vm65, %v52, 0
  %v142 = vsel %vm65, %v53, 0
  %v145 = vsel %vm65, %v54, 0
  %v148 = vsel %vm65, %v55, 0
  %v151 = vsel %vm65, %v56, 0
  %v154 = vsel %vm65, %v57, 0
  %v157 = vsel %vm65, %v58, 0
  %v160 = vsel %vm65, %v59, 0
  %162 = vmatpush.msra.mxu0 0.0
  %163 = vmatpush.msra.mxu0 0.0
  %164 = vmatpush.msra.mxu0 0.0
  %165 = vmatpush.msra.mxu0 0.0
  %166 = vmatpush.msra.mxu0 0.0
  %167 = vmatpush.msra.mxu0 0.0
  %168 = vmatpush.msra.mxu0 0.0
  %169 = vmatpush.msra.mxu0 0.0
  %170 = vmatpush.msra.mxu0 0.0
  %171 = vmatpush.msra.mxu0 0.0
  %172 = vmatpush.msra.mxu0 0.0
  %173 = vmatpush.msra.mxu0 0.0
  %174 = vmatpush.msra.mxu0 0.0
  %175 = vmatpush.msra.mxu0 0.0
  %176 = vmatpush.msra.mxu0 0.0
  %177 = vmatpush.msra.mxu0 %v60
  %178 = vmatmul.f32.gmra.mxu0 %v67
  %v179 = vpop.f32.mrf.mxu0
  %v180 = vadd.f32 %v63, %v179
  %181 = vmatmul.f32.gmra.mxu0 %v70
  %v182 = vpop.f32.mrf.mxu0
  %v183 = vadd.f32 %v63, %v182
  %184 = vmatmul.f32.gmra.mxu0 %v73
  %v185 = vpop.f32.mrf.mxu0
  %v186 = vadd.f32 %v63, %v185
  %187 = vmatmul.f32.gmra.mxu0 %v76
  %v188 = vpop.f32.mrf.mxu0
  %v189 = vadd.f32 %v63, %v188
  %190 = vmatmul.f32.gmra.mxu0 %v79
  %v191 = vpop.f32.mrf.mxu0
  %v192 = vadd.f32 %v63, %v191
  %193 = vmatmul.f32.gmra.mxu0 %v82
  %v194 = vpop.f32.mrf.mxu0
  %v195 = vadd.f32 %v63, %v194
  %196 = vmatmul.f32.gmra.mxu0 %v85
  %v197 = vpop.f32.mrf.mxu0
  %v198 = vadd.f32 %v63, %v197
  %199 = vmatmul.f32.gmra.mxu0 %v88
  %v200 = vpop.f32.mrf.mxu0
  %v201 = vadd.f32 %v63, %v200
  %202 = vmatmul.f32.gmra.mxu0 %v91
  %v203 = vpop.f32.mrf.mxu0
  %v204 = vadd.f32 %v63, %v203
  %205 = vmatmul.f32.gmra.mxu0 %v94
  %v206 = vpop.f32.mrf.mxu0
  %v207 = vadd.f32 %v63, %v206
  %208 = vmatmul.f32.gmra.mxu0 %v97
  %v209 = vpop.f32.mrf.mxu0
  %v210 = vadd.f32 %v63, %v209
  %211 = vmatmul.f32.gmra.mxu0 %v100
  %v212 = vpop.f32.mrf.mxu0
  %v213 = vadd.f32 %v63, %v212
  %214 = vmatmul.f32.gmra.mxu0 %v103
  %v215 = vpop.f32.mrf.mxu0
  %v216 = vadd.f32 %v63, %v215
  %217 = vmatmul.f32.gmra.mxu0 %v106
  %v218 = vpop.f32.mrf.mxu0
  %v219 = vadd.f32 %v63, %v218
  %220 = vmatmul.f32.gmra.mxu0 %v109
  %v221 = vpop.f32.mrf.mxu0
  %v222 = vadd.f32 %v63, %v221
  %223 = vmatmul.f32.gmra.mxu0 %v112
  %v224 = vpop.f32.mrf.mxu0
  %v225 = vadd.f32 %v63, %v224
  %226 = vmatmul.f32.gmra.mxu0 %v115
  %v227 = vpop.f32.mrf.mxu0
  %v228 = vadd.f32 %v63, %v227
  %229 = vmatmul.f32.gmra.mxu0 %v118
  %v230 = vpop.f32.mrf.mxu0
  %v231 = vadd.f32 %v63, %v230
  %232 = vmatmul.f32.gmra.mxu0 %v121
  %v233 = vpop.f32.mrf.mxu0
  %v234 = vadd.f32 %v63, %v233
  %235 = vmatmul.f32.gmra.mxu0 %v124
  %v236 = vpop.f32.mrf.mxu0
  %v237 = vadd.f32 %v63, %v236
  %238 = vmatmul.f32.gmra.mxu0 %v127
  %v239 = vpop.f32.mrf.mxu0
  %v240 = vadd.f32 %v63, %v239
  %241 = vmatmul.f32.gmra.mxu0 %v130
  %v242 = vpop.f32.mrf.mxu0
  %v243 = vadd.f32 %v63, %v242
  %244 = vmatmul.f32.gmra.mxu0 %v133
  %v245 = vpop.f32.mrf.mxu0
  %v246 = vadd.f32 %v63, %v245
  %247 = vmatmul.f32.gmra.mxu0 %v136
  %v248 = vpop.f32.mrf.mxu0
  %v249 = vadd.f32 %v63, %v248
  %250 = vmatmul.f32.gmra.mxu0 %v139
  %v251 = vpop.f32.mrf.mxu0
  %v252 = vadd.f32 %v63, %v251
  %253 = vmatmul.f32.gmra.mxu0 %v142
  %v254 = vpop.f32.mrf.mxu0
  %v255 = vadd.f32 %v63, %v254
  %256 = vmatmul.f32.gmra.mxu0 %v145
  %v257 = vpop.f32.mrf.mxu0
  %v258 = vadd.f32 %v63, %v257
  %259 = vmatmul.f32.gmra.mxu0 %v148
  %v260 = vpop.f32.mrf.mxu0
  %v261 = vadd.f32 %v63, %v260
  %262 = vmatmul.f32.gmra.mxu0 %v151
  %v263 = vpop.f32.mrf.mxu0
  %v264 = vadd.f32 %v63, %v263
  %265 = vmatmul.f32.gmra.mxu0 %v154
  %v266 = vpop.f32.mrf.mxu0
  %v267 = vadd.f32 %v63, %v266
  %268 = vmatmul.f32.gmra.mxu0 %v157
  %v269 = vpop.f32.mrf.mxu0
  %v270 = vadd.f32 %v63, %v269
  %271 = vmatmul.f32.gmra.mxu0 %v160
  %v272 = vpop.f32.mrf.mxu0
  %v273 = vadd.f32 %v63, %v272
  %274 = vdwg.mxu0
  %v275 = vmax.f32 %v180, 0.0
  %v276 = vmax.f32 %v183, 0.0
  %v277 = vmax.f32 %v186, 0.0
  %v278 = vmax.f32 %v189, 0.0
  %v279 = vmax.f32 %v192, 0.0
  %v280 = vmax.f32 %v195, 0.0
  %v281 = vmax.f32 %v198, 0.0
  %v282 = vmax.f32 %v201, 0.0
  %v283 = vmax.f32 %v204, 0.0
  %v284 = vmax.f32 %v207, 0.0
  %v285 = vmax.f32 %v210, 0.0
  %v286 = vmax.f32 %v213, 0.0
  %v287 = vmax.f32 %v216, 0.0
  %v288 = vmax.f32 %v219, 0.0
  %v289 = vmax.f32 %v222, 0.0
  %v290 = vmax.f32 %v225, 0.0
  %v291 = vmax.f32 %v228, 0.0
  %v292 = vmax.f32 %v231, 0.0
  %v293 = vmax.f32 %v234, 0.0
  %v294 = vmax.f32 %v237, 0.0
  %v295 = vmax.f32 %v240, 0.0
  %v296 = vmax.f32 %v243, 0.0
  %v297 = vmax.f32 %v246, 0.0
  %v298 = vmax.f32 %v249, 0.0
  %v299 = vmax.f32 %v252, 0.0
  %v300 = vmax.f32 %v255, 0.0
  %v301 = vmax.f32 %v258, 0.0
  %v302 = vmax.f32 %v261, 0.0
  %v303 = vmax.f32 %v264, 0.0
  %v304 = vmax.f32 %v267, 0.0
  %v305 = vmax.f32 %v270, 0.0
  %v306 = vmax.f32 %v273, 0.0
  %v307 = vld [vmem:[%s3] sm:$0xff]
  %v308 = vld [vmem:[%s3 + $0x8] sm:$0xff]
  %v309 = vld [vmem:[%s3 + $0x10] sm:$0xff]
  %v310 = vld [vmem:[%s3 + $0x18] sm:$0xff]
  %v311 = vld [vmem:[%s3 + $0x20] sm:$0xff]
  %v312 = vld [vmem:[%s3 + $0x28] sm:$0xff]
  %v313 = vld [vmem:[%s3 + $0x30] sm:$0xff]
  %v314 = vld [vmem:[%s3 + $0x38] sm:$0xff]
  %v315 = vld [vmem:[%s4] sm:$0x1]
  %v317 = vperm.slane %v315, 0
  %vm319 = vcmask 523264
  %v321 = vsel %vm319, %v275, 0
  %v324 = vsel %vm319, %v276, 0
  %v327 = vsel %vm319, %v277, 0
  %v330 = vsel %vm319, %v278, 0
  %v333 = vsel %vm319, %v279, 0
  %v336 = vsel %vm319, %v280, 0
  %v339 = vsel %vm319, %v281, 0
  %v342 = vsel %vm319, %v282, 0
  %v345 = vsel %vm319, %v283, 0
  %v348 = vsel %vm319, %v284, 0
  %v351 = vsel %vm319, %v285, 0
  %v354 = vsel %vm319, %v286, 0
  %v357 = vsel %vm319, %v287, 0
  %v360 = vsel %vm319, %v288, 0
  %v363 = vsel %vm319, %v289, 0
  %v366 = vsel %vm319, %v290, 0
  %v369 = vsel %vm319, %v291, 0
  %v372 = vsel %vm319, %v292, 0
  %v375 = vsel %vm319, %v293, 0
  %v378 = vsel %vm319, %v294, 0
  %v381 = vsel %vm319, %v295, 0
  %v384 = vsel %vm319, %v296, 0
  %v387 = vsel %vm319, %v297, 0
  %v390 = vsel %vm319, %v298, 0
  %v393 = vsel %vm319, %v299, 0
  %v396 = vsel %vm319, %v300, 0
  %v399 = vsel %vm319, %v301, 0
  %v402 = vsel %vm319, %v302, 0
  %v405 = vsel %vm319, %v303, 0
  %v408 = vsel %vm319, %v304, 0
  %v411 = vsel %vm319, %v305, 0
  %v414 = vsel %vm319, %v306, 0
  %416 = vmatpush.msra.mxu0 0.0
  %417 = vmatpush.msra.mxu0 0.0
  %418 = vmatpush.msra.mxu0 0.0
  %419 = vmatpush.msra.mxu0 0.0
  %420 = vmatpush.msra.mxu0 0.0
  %421 = vmatpush.msra.mxu0 0.0
  %422 = vmatpush.msra.mxu0 0.0
  %423 = vmatpush.msra.mxu0 0.0
  %424 = vmatpush.msra.mxu0 %v314
  %425 = vmatpush.msra.mxu0 %v313
  %426 = vmatpush.msra.mxu0 %v312
  %427 = vmatpush.msra.mxu0 %v311
  %428 = vmatpush.msra.mxu0 %v310
  %429 = vmatpush.msra.mxu0 %v309
  %430 = vmatpush.msra.mxu0 %v308
  %431 = vmatpush.msra.mxu0 %v307
  %432 = vmatmul.f32.gmra.mxu0 %v321
  %v433 = vpop.f32.mrf.mxu0
  %v434 = vadd.f32 %v317, %v433
  %435 = vmatmul.f32.gmra.mxu0 %v324
  %v436 = vpop.f32.mrf.mxu0
  %v437 = vadd.f32 %v317, %v436
  %438 = vmatmul.f32.gmra.mxu0 %v327
  %v439 = vpop.f32.mrf.mxu0
  %v440 = vadd.f32 %v317, %v439
  %441 = vmatmul.f32.gmra.mxu0 %v330
  %v442 = vpop.f32.mrf.mxu0
  %v443 = vadd.f32 %v317, %v442
  %444 = vmatmul.f32.gmra.mxu0 %v333
  %v445 = vpop.f32.mrf.mxu0
  %v446 = vadd.f32 %v317, %v445
  %447 = vmatmul.f32.gmra.mxu0 %v336
  %v448 = vpop.f32.mrf.mxu0
  %v449 = vadd.f32 %v317, %v448
  %450 = vmatmul.f32.gmra.mxu0 %v339
  %v451 = vpop.f32.mrf.mxu0
  %v452 = vadd.f32 %v317, %v451
  %453 = vmatmul.f32.gmra.mxu0 %v342
  %v454 = vpop.f32.mrf.mxu0
  %v455 = vadd.f32 %v317, %v454
  %456 = vmatmul.f32.gmra.mxu0 %v345
  %v457 = vpop.f32.mrf.mxu0
  %v458 = vadd.f32 %v317, %v457
  %459 = vmatmul.f32.gmra.mxu0 %v348
  %v460 = vpop.f32.mrf.mxu0
  %v461 = vadd.f32 %v317, %v460
  %462 = vmatmul.f32.gmra.mxu0 %v351
  %v463 = vpop.f32.mrf.mxu0
  %v464 = vadd.f32 %v317, %v463
  %465 = vmatmul.f32.gmra.mxu0 %v354
  %v466 = vpop.f32.mrf.mxu0
  %v467 = vadd.f32 %v317, %v466
  %468 = vmatmul.f32.gmra.mxu0 %v357
  %v469 = vpop.f32.mrf.mxu0
  %v470 = vadd.f32 %v317, %v469
  %471 = vmatmul.f32.gmra.mxu0 %v360
  %v472 = vpop.f32.mrf.mxu0
  %v473 = vadd.f32 %v317, %v472
  %474 = vmatmul.f32.gmra.mxu0 %v363
  %v475 = vpop.f32.mrf.mxu0
  %v476 = vadd.f32 %v317, %v475
  %477 = vmatmul.f32.gmra.mxu0 %v366
  %v478 = vpop.f32.mrf.mxu0
  %v479 = vadd.f32 %v317, %v478
  %480 = vmatmul.f32.gmra.mxu0 %v369
  %v481 = vpop.f32.mrf.mxu0
  %v482 = vadd.f32 %v317, %v481
  %483 = vmatmul.f32.gmra.mxu0 %v372
  %v484 = vpop.f32.mrf.mxu0
  %v485 = vadd.f32 %v317, %v484
  %486 = vmatmul.f32.gmra.mxu0 %v375
  %v487 = vpop.f32.mrf.mxu0
  %v488 = vadd.f32 %v317, %v487
  %489 = vmatmul.f32.gmra.mxu0 %v378
  %v490 = vpop.f32.mrf.mxu0
  %v491 = vadd.f32 %v317, %v490
  %492 = vmatmul.f32.gmra.mxu0 %v381
  %v493 = vpop.f32.mrf.mxu0
  %v494 = vadd.f32 %v317, %v493
  %495 = vmatmul.f32.gmra.mxu0 %v384
  %v496 = vpop.f32.mrf.mxu0
  %v497 = vadd.f32 %v317, %v496
  %498 = vmatmul.f32.gmra.mxu0 %v387
  %v499 = vpop.f32.mrf.mxu0
  %v500 = vadd.f32 %v317, %v499
  %501 = vmatmul.f32.gmra.mxu0 %v390
  %v502 = vpop.f32.mrf.mxu0
  %v503 = vadd.f32 %v317, %v502
  %504 = vmatmul.f32.gmra.mxu0 %v393
  %v505 = vpop.f32.mrf.mxu0
  %v506 = vadd.f32 %v317, %v505
  %507 = vmatmul.f32.gmra.mxu0 %v396
  %v508 = vpop.f32.mrf.mxu0
  %v509 = vadd.f32 %v317, %v508
  %510 = vmatmul.f32.gmra.mxu0 %v399
  %v511 = vpop.f32.mrf.mxu0
  %v512 = vadd.f32 %v317, %v511
  %513 = vmatmul.f32.gmra.mxu0 %v402
  %v514 = vpop.f32.mrf.mxu0
  %v515 = vadd.f32 %v317, %v514
  %516 = vmatmul.f32.gmra.mxu0 %v405
  %v517 = vpop.f32.mrf.mxu0
  %v518 = vadd.f32 %v317, %v517
  %519 = vmatmul.f32.gmra.mxu0 %v408
  %v520 = vpop.f32.mrf.mxu0
  %v521 = vadd.f32 %v317, %v520
  %522 = vmatmul.f32.gmra.mxu0 %v411
  %v523 = vpop.f32.mrf.mxu0
  %v524 = vadd.f32 %v317, %v523
  %525 = vmatmul.f32.gmra.mxu0 %v414
  %v526 = vpop.f32.mrf.mxu0
  %v527 = vadd.f32 %v317, %v526
  %528 = vdwg.mxu0
  %v529 = vmax.f32 %v434, 0.0
  %v530 = vmax.f32 %v437, 0.0
  %v531 = vmax.f32 %v440, 0.0
  %v532 = vmax.f32 %v443, 0.0
  %v533 = vmax.f32 %v446, 0.0
  %v534 = vmax.f32 %v449, 0.0
  %v535 = vmax.f32 %v452, 0.0
  %v536 = vmax.f32 %v455, 0.0
  %v537 = vmax.f32 %v458, 0.0
  %v538 = vmax.f32 %v461, 0.0
  %v539 = vmax.f32 %v464, 0.0
  %v540 = vmax.f32 %v467, 0.0
  %v541 = vmax.f32 %v470, 0.0
  %v542 = vmax.f32 %v473, 0.0
  %v543 = vmax.f32 %v476, 0.0
  %v544 = vmax.f32 %v479, 0.0
  %v545 = vmax.f32 %v482, 0.0
  %v546 = vmax.f32 %v485, 0.0
  %v547 = vmax.f32 %v488, 0.0
  %v548 = vmax.f32 %v491, 0.0
  %v549 = vmax.f32 %v494, 0.0
  %v550 = vmax.f32 %v497, 0.0
  %v551 = vmax.f32 %v500, 0.0
  %v552 = vmax.f32 %v503, 0.0
  %v553 = vmax.f32 %v506, 0.0
  %v554 = vmax.f32 %v509, 0.0
  %v555 = vmax.f32 %v512, 0.0
  %v556 = vmax.f32 %v515, 0.0
  %v557 = vmax.f32 %v518, 0.0
  %v558 = vmax.f32 %v521, 0.0
  %v559 = vmax.f32 %v524, 0.0
  %v560 = vmax.f32 %v527, 0.0
  %v561 = vld [vmem:[%s5] sm:$0x1]
  %v563 = vperm.slane %v561, 0
  %v565 = vmul.f32 %v529, %v563
  %v566 = vmul.f32 %v530, %v563
  %v567 = vmul.f32 %v531, %v563
  %v568 = vmul.f32 %v532, %v563
  %v569 = vmul.f32 %v533, %v563
  %v570 = vmul.f32 %v534, %v563
  %v571 = vmul.f32 %v535, %v563
  %v572 = vmul.f32 %v536, %v563
  %v573 = vmul.f32 %v537, %v563
  %v574 = vmul.f32 %v538, %v563
  %v575 = vmul.f32 %v539, %v563
  %v576 = vmul.f32 %v540, %v563
  %v577 = vmul.f32 %v541, %v563
  %v578 = vmul.f32 %v542, %v563
  %v579 = vmul.f32 %v543, %v563
  %v580 = vmul.f32 %v544, %v563
  %v581 = vmul.f32 %v545, %v563
  %v582 = vmul.f32 %v546, %v563
  %v583 = vmul.f32 %v547, %v563
  %v584 = vmul.f32 %v548, %v563
  %v585 = vmul.f32 %v549, %v563
  %v586 = vmul.f32 %v550, %v563
  %v587 = vmul.f32 %v551, %v563
  %v588 = vmul.f32 %v552, %v563
  %v589 = vmul.f32 %v553, %v563
  %v590 = vmul.f32 %v554, %v563
  %v591 = vmul.f32 %v555, %v563
  %v592 = vmul.f32 %v556, %v563
  %v593 = vmul.f32 %v557, %v563
  %v594 = vmul.f32 %v558, %v563
  %v595 = vmul.f32 %v559, %v563
  %v596 = vmul.f32 %v560, %v563
  %v597 = vsel %vm319, %v565, 0.0
  %598 = vadd.xlane.f32.xlu0 %v597
  %v599 = vpop.xlane.xlu0 %598
  %v600 = vsel %vm319, %v566, 0.0
  %601 = vadd.xlane.f32.xlu0 %v600
  %v602 = vpop.xlane.xlu0 %601
  %v603 = vsel %vm319, %v567, 0.0
  %604 = vadd.xlane.f32.xlu0 %v603
  %v605 = vpop.xlane.xlu0 %604
  %v606 = vsel %vm319, %v568, 0.0
  %607 = vadd.xlane.f32.xlu0 %v606
  %v608 = vpop.xlane.xlu0 %607
  %v609 = vsel %vm319, %v569, 0.0
  %610 = vadd.xlane.f32.xlu0 %v609
  %v611 = vpop.xlane.xlu0 %610
  %v612 = vsel %vm319, %v570, 0.0
  %613 = vadd.xlane.f32.xlu0 %v612
  %v614 = vpop.xlane.xlu0 %613
  %v615 = vsel %vm319, %v571, 0.0
  %616 = vadd.xlane.f32.xlu0 %v615
  %v617 = vpop.xlane.xlu0 %616
  %v618 = vsel %vm319, %v572, 0.0
  %619 = vadd.xlane.f32.xlu0 %v618
  %v620 = vpop.xlane.xlu0 %619
  %v621 = vsel %vm319, %v573, 0.0
  %622 = vadd.xlane.f32.xlu0 %v621
  %v623 = vpop.xlane.xlu0 %622
  %v624 = vsel %vm319, %v574, 0.0
  %625 = vadd.xlane.f32.xlu0 %v624
  %v626 = vpop.xlane.xlu0 %625
  %v627 = vsel %vm319, %v575, 0.0
  %628 = vadd.xlane.f32.xlu0 %v627
  %v629 = vpop.xlane.xlu0 %628
  %v630 = vsel %vm319, %v576, 0.0
  %631 = vadd.xlane.f32.xlu0 %v630
  %v632 = vpop.xlane.xlu0 %631
  %v633 = vsel %vm319, %v577, 0.0
  %634 = vadd.xlane.f32.xlu0 %v633
  %v635 = vpop.xlane.xlu0 %634
  %v636 = vsel %vm319, %v578, 0.0
  %637 = vadd.xlane.f32.xlu0 %v636
  %v638 = vpop.xlane.xlu0 %637
  %v639 = vsel %vm319, %v579, 0.0
  %640 = vadd.xlane.f32.xlu0 %v639
  %v641 = vpop.xlane.xlu0 %640
  %v642 = vsel %vm319, %v580, 0.0
  %643 = vadd.xlane.f32.xlu0 %v642
  %v644 = vpop.xlane.xlu0 %643
  %v645 = vsel %vm319, %v581, 0.0
  %646 = vadd.xlane.f32.xlu0 %v645
  %v647 = vpop.xlane.xlu0 %646
  %v648 = vsel %vm319, %v582, 0.0
  %649 = vadd.xlane.f32.xlu0 %v648
  %v650 = vpop.xlane.xlu0 %649
  %v651 = vsel %vm319, %v583, 0.0
  %652 = vadd.xlane.f32.xlu0 %v651
  %v653 = vpop.xlane.xlu0 %652
  %v654 = vsel %vm319, %v584, 0.0
  %655 = vadd.xlane.f32.xlu0 %v654
  %v656 = vpop.xlane.xlu0 %655
  %v657 = vsel %vm319, %v585, 0.0
  %658 = vadd.xlane.f32.xlu0 %v657
  %v659 = vpop.xlane.xlu0 %658
  %v660 = vsel %vm319, %v586, 0.0
  %661 = vadd.xlane.f32.xlu0 %v660
  %v662 = vpop.xlane.xlu0 %661
  %v663 = vsel %vm319, %v587, 0.0
  %664 = vadd.xlane.f32.xlu0 %v663
  %v665 = vpop.xlane.xlu0 %664
  %v666 = vsel %vm319, %v588, 0.0
  %667 = vadd.xlane.f32.xlu0 %v666
  %v668 = vpop.xlane.xlu0 %667
  %v669 = vsel %vm319, %v589, 0.0
  %670 = vadd.xlane.f32.xlu0 %v669
  %v671 = vpop.xlane.xlu0 %670
  %v672 = vsel %vm319, %v590, 0.0
  %673 = vadd.xlane.f32.xlu0 %v672
  %v674 = vpop.xlane.xlu0 %673
  %v675 = vsel %vm319, %v591, 0.0
  %676 = vadd.xlane.f32.xlu0 %v675
  %v677 = vpop.xlane.xlu0 %676
  %v678 = vsel %vm319, %v592, 0.0
  %679 = vadd.xlane.f32.xlu0 %v678
  %v680 = vpop.xlane.xlu0 %679
  %v681 = vsel %vm319, %v593, 0.0
  %682 = vadd.xlane.f32.xlu0 %v681
  %v683 = vpop.xlane.xlu0 %682
  %v684 = vsel %vm319, %v594, 0.0
  %685 = vadd.xlane.f32.xlu0 %v684
  %v686 = vpop.xlane.xlu0 %685
  %v687 = vsel %vm319, %v595, 0.0
  %688 = vadd.xlane.f32.xlu0 %v687
  %v689 = vpop.xlane.xlu0 %688
  %v690 = vsel %vm319, %v596, 0.0
  %691 = vadd.xlane.f32.xlu0 %v690
  %v692 = vpop.xlane.xlu0 %691
  %v693 = vld [vmem:[#allocation2] sm:$0x1]
  %v695 = vperm.slane %v693, 0
  %v697 = vadd.f32 %v599, %v695
  %v698 = vadd.f32 %v602, %v695
  %v699 = vadd.f32 %v605, %v695
  %v700 = vadd.f32 %v608, %v695
  %v701 = vadd.f32 %v611, %v695
  %v702 = vadd.f32 %v614, %v695
  %v703 = vadd.f32 %v617, %v695
  %v704 = vadd.f32 %v620, %v695
  %v705 = vadd.f32 %v623, %v695
  %v706 = vadd.f32 %v626, %v695
  %v707 = vadd.f32 %v629, %v695
  %v708 = vadd.f32 %v632, %v695
  %v709 = vadd.f32 %v635, %v695
  %v710 = vadd.f32 %v638, %v695
  %v711 = vadd.f32 %v641, %v695
  %v712 = vadd.f32 %v644, %v695
  %v713 = vadd.f32 %v647, %v695
  %v714 = vadd.f32 %v650, %v695
  %v715 = vadd.f32 %v653, %v695
  %v716 = vadd.f32 %v656, %v695
  %v717 = vadd.f32 %v659, %v695
  %v718 = vadd.f32 %v662, %v695
  %v719 = vadd.f32 %v665, %v695
  %v720 = vadd.f32 %v668, %v695
  %v721 = vadd.f32 %v671, %v695
  %v722 = vadd.f32 %v674, %v695
  %v723 = vadd.f32 %v677, %v695
  %v724 = vadd.f32 %v680, %v695
  %v725 = vadd.f32 %v683, %v695
  %v726 = vadd.f32 %v686, %v695
  %v727 = vadd.f32 %v689, %v695
  %v728 = vadd.f32 %v692, %v695
  %vm729 = vcmask 7168
  %730 = vst.msk [vmem:[%s7] sm:$0xff] %vm729, %v697
  %731 = vst.msk [vmem:[%s7 + $0x8] sm:$0xff] %vm729, %v698
  %732 = vst.msk [vmem:[%s7 + $0x10] sm:$0xff] %vm729, %v699
  %733 = vst.msk [vmem:[%s7 + $0x18] sm:$0xff] %vm729, %v700
  %734 = vst.msk [vmem:[%s7 + $0x20] sm:$0xff] %vm729, %v701
  %735 = vst.msk [vmem:[%s7 + $0x28] sm:$0xff] %vm729, %v702
  %736 = vst.msk [vmem:[%s7 + $0x30] sm:$0xff] %vm729, %v703
  %737 = vst.msk [vmem:[%s7 + $0x38] sm:$0xff] %vm729, %v704
  %738 = vst.msk [vmem:[%s7 + $0x40] sm:$0xff] %vm729, %v705
  %739 = vst.msk [vmem:[%s7 + $0x48] sm:$0xff] %vm729, %v706
  %740 = vst.msk [vmem:[%s7 + $0x50] sm:$0xff] %vm729, %v707
  %741 = vst.msk [vmem:[%s7 + $0x58] sm:$0xff] %vm729, %v708
  %742 = vst.msk [vmem:[%s7 + $0x60] sm:$0xff] %vm729, %v709
  %743 = vst.msk [vmem:[%s7 + $0x68] sm:$0xff] %vm729, %v710
  %744 = vst.msk [vmem:[%s7 + $0x70] sm:$0xff] %vm729, %v711
  %745 = vst.msk [vmem:[%s7 + $0x78] sm:$0xff] %vm729, %v712
  %746 = vst.msk [vmem:[%s7 + $0x80] sm:$0xff] %vm729, %v713
  %747 = vst.msk [vmem:[%s7 + $0x88] sm:$0xff] %vm729, %v714
  %748 = vst.msk [vmem:[%s7 + $0x90] sm:$0xff] %vm729, %v715
  %749 = vst.msk [vmem:[%s7 + $0x98] sm:$0xff] %vm729, %v716
  %750 = vst.msk [vmem:[%s7 + $0xa0] sm:$0xff] %vm729, %v717
  %751 = vst.msk [vmem:[%s7 + $0xa8] sm:$0xff] %vm729, %v718
  %752 = vst.msk [vmem:[%s7 + $0xb0] sm:$0xff] %vm729, %v719
  %753 = vst.msk [vmem:[%s7 + $0xb8] sm:$0xff] %vm729, %v720
  %754 = vst.msk [vmem:[%s7 + $0xc0] sm:$0xff] %vm729, %v721
  %755 = vst.msk [vmem:[%s7 + $0xc8] sm:$0xff] %vm729, %v722
  %756 = vst.msk [vmem:[%s7 + $0xd0] sm:$0xff] %vm729, %v723
  %757 = vst.msk [vmem:[%s7 + $0xd8] sm:$0xff] %vm729, %v724
  %758 = vst.msk [vmem:[%s7 + $0xe0] sm:$0xff] %vm729, %v725
  %759 = vst.msk [vmem:[%s7 + $0xe8] sm:$0xff] %vm729, %v726
  %760 = vst.msk [vmem:[%s7 + $0xf0] sm:$0xff] %vm729, %v727
  %761 = vst.msk [vmem:[%s7 + $0xf8] sm:$0xff] %vm729, %v728
  // Predicated region
  $region30: #{tpu_custom_call.1} parent=0 // pred_check
    _
  $region31: #{tpu_custom_call.1} parent=0 // pred_check_branch
    %763 = sbr.rel (0) target = $region33
  $region32: #{tpu_custom_call.1} parent=0 // pred_region
    _
  $region33: #{tpu_custom_call.1} parent=0 // pred_fallthru
    _
  // Predicated region
  $region34: #{tpu_custom_call.1} parent=0 // pred_check
    _
  $region35: #{tpu_custom_call.1} parent=0 // pred_check_branch
    %765 = sbr.rel (0) target = $region37
  $region36: #{tpu_custom_call.1} parent=0 // pred_region
    _
  $region37: #{tpu_custom_call.1} parent=0 // pred_fallthru
    _

</llo_original>
